<compile_context>
chip_gen: v6e
topology: v6e:2x2x1
jax: 0.10.0
libtpu: 0.0.40
codegen_flags: <defaults>
</compile_context>

<pallas_src>
import functools

import jax
import jax.numpy as jnp
from jax.experimental import pallas as pl
from jax.experimental.pallas import tpu as pltpu


_NEG_INF = -1e30


def _vmem_limit_bytes():
    """Generation-aware VMEM budget: ~3/4 of capacity, capped at 100 MiB."""
    cap = 64 * 1024 * 1024
    try:
        cap = int(pltpu.get_tpu_info().vmem_capacity_bytes)
    except Exception:
        pass
    return max(32 * 1024 * 1024, min((cap * 3) // 4, 100 * 1024 * 1024))


def _round_up(n, m):
    return ((n + m - 1) // m) * m


def _pad_n(n):
    """Pad the node count so row/K tiles stay large and lane-aligned."""
    return _round_up(n, 128) if n >= 128 else _round_up(n, 8)


def _pick_row_tile(n_pad):
    for t in (512, 256, 128, 64, 32, 16, 8):
        if t <= n_pad and n_pad % t == 0:
            return t
    return n_pad


def _pick_k_tile(n_pad):
    # K tile is the lane (last) dim of the adjacency / s_src blocks: it must be
    # a multiple of 128 unless it covers the whole (padded) node axis.
    for t in (512, 256, 128):
        if t <= n_pad and n_pad % t == 0:
            return t
    return n_pad


def _gat_project_kernel(x_ref, w_ref, xh_ref, s_ref, *, hc):
    """Fused all-head projection + attention-score columns (one bf16 matmul).

    xs = x @ [W_all | W_score]  -> [row_tile, H*C + 2H]   (f32 accumulation)
    xh = xs[:, :H*C]  (stored bf16) ; s = xs[:, H*C:]  (f32 per-head scores)
    """
    x = x_ref[...].astype(jnp.bfloat16)
    xs = jnp.dot(x, w_ref[...], preferred_element_type=jnp.float32)
    xh_ref[...] = xs[:, :hc].astype(xh_ref.dtype)
    s_ref[...] = xs[:, hc:]


def _gat_attn_kernel(xh_ref, s_src_ref, s_dst_ref, adj_ref, bias_ref, out_ref,
                     m_sc, l_sc, acc_sc, *, num_heads, head_dim, activation):
    """Online-softmax attention for one (row tile, K tile) grid point."""
    k_idx = pl.program_id(1)

    @pl.when(k_idx == 0)
    def _():
        m_sc[...] = jnp.full_like(m_sc, _NEG_INF)
        l_sc[...] = jnp.zeros_like(l_sc)
        acc_sc[...] = jnp.zeros_like(acc_sc)

    xh_k = xh_ref[...]                                   # [k_tile, H*C] bf16
    s_src = s_src_ref[...]                               # [H, k_tile]   f32
    s_dst = s_dst_ref[...]                               # [row_t, H]    f32
    # int8 adjacency -> additive 0 / -1e30 mask, built once and reused per head.
    edge_f = adj_ref[...].astype(jnp.float32)            # [row_t, k_tile]
    neg_mask = jnp.where(edge_f > 0.0, 0.0, _NEG_INF)

    for h in range(num_heads):                           # H small & static -> unrolled
        lo, hi = h * head_dim, (h + 1) * head_dim
        e = s_dst[:, h:h + 1] + s_src[h:h + 1, :]        # [row_t, k_tile]
        e = jnp.maximum(e, 0.2 * e)                      # LeakyReLU(0.2)
        e = e + neg_mask                                 # mask non-edges
        m_old = m_sc[:, h:h + 1]
        m_new = jnp.maximum(m_old, jnp.max(e, axis=-1, keepdims=True))
        corr = jnp.exp(m_old - m_new)
        p = jnp.exp(e - m_new)                           # masked entries -> 0
        l_sc[:, h:h + 1] = corr * l_sc[:, h:h + 1] + jnp.sum(p, axis=-1,
                                                             keepdims=True)
        agg = jnp.dot(p.astype(jnp.bfloat16), xh_k[:, lo:hi],
                      preferred_element_type=jnp.float32)     # [row_t, C]
        acc_sc[:, lo:hi] = corr * acc_sc[:, lo:hi] + agg
        m_sc[:, h:h + 1] = m_new

    @pl.when(k_idx == pl.num_programs(1) - 1)
    def _():
        cols = []
        for h in range(num_heads):
            lo, hi = h * head_dim, (h + 1) * head_dim
            inv = pl.reciprocal(l_sc[:, h:h + 1], approx=True)   # EUP slot
            cols.append(acc_sc[:, lo:hi] * inv)
        out = jnp.concatenate(cols, axis=-1) + bias_ref[...]     # [row_t, H*C]

        if activation == "relu":
            out = jnp.maximum(out, 0.0)
        elif activation == "leaky_relu":
            out = jnp.maximum(out, 0.01 * out)
        elif activation == "gelu":
            # TODO(synk): torch F.gelu default is exact erf-gelu; tanh approx here.
            out = jax.nn.gelu(out, approximate=True)

        out_ref[...] = out.astype(out_ref.dtype)


def gat_layer(x, w, a_src, a_dst, bias, adj_i8, *, activation, out_dtype,
              row_tile=None, k_tile=None):
    """One GATConv layer: fused projection kernel + online-softmax attention."""
    n_pad, f_in = x.shape
    H, _, C = w.shape
    HC = H * C

    if row_tile is None or row_tile <= 0 or n_pad % row_tile or row_tile % 8:
        row_tile = _pick_row_tile(n_pad)
    if (k_tile is None or k_tile <= 0 or n_pad % k_tile
            or (k_tile != n_pad and k_tile % 128)):
        k_tile = _pick_k_tile(n_pad)
    n_row_tiles = n_pad // row_tile
    n_k_tiles = n_pad // k_tile
    vmem = _vmem_limit_bytes()

    # ---- weight prep (tiny XLA glue, once per layer) ----------------------
    # Heads fused into one lane-dense projection matrix [F_in, H*C]; the
    # attention vectors are folded in as 2H extra "free rider" columns:
    #   s_src[n, h] = a_src_h . (x_n @ W_h) = x_n @ (W_all @ A_src)[:, h]
    w_all = jnp.transpose(w, (1, 0, 2)).reshape(f_in, HC)
    eye = jnp.eye(H, dtype=jnp.float32)
    a_src_mat = (a_src.reshape(H, C)[:, :, None] * eye[:, None, :]).reshape(HC, H)
    a_dst_mat = (a_dst.reshape(H, C)[:, :, None] * eye[:, None, :]).reshape(HC, H)
    w_score = w_all @ jnp.concatenate([a_src_mat, a_dst_mat], axis=1)   # [F_in, 2H]
    w_fused = jnp.concatenate([w_all, w_score], axis=1).astype(jnp.bfloat16)

    # ---- kernel 1: fused projection (bf16 MXU) -----------------------------
    xh, s = pl.pallas_call(
        functools.partial(_gat_project_kernel, hc=HC),
        out_shape=(jax.ShapeDtypeStruct((n_pad, HC), jnp.bfloat16),
                   jax.ShapeDtypeStruct((n_pad, 2 * H), jnp.float32)),
        grid_spec=pltpu.PrefetchScalarGridSpec(
            num_scalar_prefetch=0,
            grid=(n_row_tiles,),
            in_specs=[
                pl.BlockSpec((row_tile, f_in), lambda i: (i, 0)),        # x rows
                pl.BlockSpec((f_in, HC + 2 * H), lambda i: (0, 0)),      # fused W
            ],
            out_specs=[
                pl.BlockSpec((row_tile, HC), lambda i: (i, 0)),
                pl.BlockSpec((row_tile, 2 * H), lambda i: (i, 0)),
            ],
        ),
        compiler_params=pltpu.CompilerParams(
            dimension_semantics=("parallel",),
            vmem_limit_bytes=vmem),
    )(x, w_fused)

    s_src = jnp.transpose(s[:, :H])          # [H, N_pad]  (tiny glue transpose)
    s_dst = s[:, H:]                         # [N_pad, H]
    bias_row = bias.reshape(1, HC).astype(jnp.float32)

    attn_kernel = functools.partial(_gat_attn_kernel, num_heads=H, head_dim=C,
                                    activation=activation)

    # ---- kernel 2: row-tiled, K-tiled online-softmax attention -------------
    out = pl.pallas_call(
        attn_kernel,
        out_shape=jax.ShapeDtypeStruct((n_pad, HC), out_dtype),
        grid_spec=pltpu.PrefetchScalarGridSpec(
            num_scalar_prefetch=0,
            grid=(n_row_tiles, n_k_tiles),
            in_specs=[
                pl.BlockSpec((k_tile, HC), lambda i, k: (k, 0)),         # xh stream
                pl.BlockSpec((H, k_tile), lambda i, k: (0, k)),          # s_src stream
                pl.BlockSpec((row_tile, H), lambda i, k: (i, 0)),        # s_dst rows
                pl.BlockSpec((row_tile, k_tile), lambda i, k: (i, k)),   # int8 adjacency
                pl.BlockSpec((1, HC), lambda i, k: (0, 0)),              # bias
            ],
            out_specs=pl.BlockSpec((row_tile, HC), lambda i, k: (i, 0)),
            scratch_shapes=[
                pltpu.VMEM((row_tile, H), jnp.float32),     # running max
                pltpu.VMEM((row_tile, H), jnp.float32),     # running denom
                pltpu.VMEM((row_tile, HC), jnp.float32),    # accumulator
            ],
        ),
        compiler_params=pltpu.CompilerParams(
            dimension_semantics=("parallel", "arbitrary"),
            vmem_limit_bytes=vmem),
    )(xh, s_src, s_dst, adj_i8, bias_row)

    return out


def init_multilayer_gat_params(key, in_features, hidden_dims, num_head):
    params = []
    f_in = in_features
    for hd in hidden_dims:
        key, k1, k2, k3 = jax.random.split(key, 4)
        scale = 1.0 / jnp.sqrt(jnp.float32(f_in))
        w = jax.random.normal(k1, (num_head, f_in, hd), jnp.float32) * scale
        a_src = jax.random.normal(k2, (num_head, 1, hd), jnp.float32) * 0.1
        a_dst = jax.random.normal(k3, (num_head, 1, hd), jnp.float32) * 0.1
        bias = jnp.zeros((num_head, 1, hd), jnp.float32)
        params.append((w, a_src, a_dst, bias))
        f_in = hd * num_head
    return params


def multilayer_gat_forward(x, edge_index, params, *, activation="relu",
                           row_tile=None, k_tile=None):
    """MultiLayerGAT.forward: x = act(gat(x, edge_index)) for each layer."""
    n = x.shape[0]
    n_pad = _pad_n(n)

    # Dense adjacency (glue): adj[dst, src] = 1, plus self loops (PyG default).
    # Stored as int8 so the only O(N^2) HBM stream is 1 byte/entry; padded
    # rows/columns stay 0 and are masked out inside the kernel.
    src, dst = edge_index[0], edge_index[1]
    adj = jnp.zeros((n_pad, n_pad), jnp.int8)
    adj = adj.at[dst, src].set(1)
    idx = jnp.arange(n)
    adj = adj.at[idx, idx].set(1)
    # TODO(synk): for sparse graphs, add scalar-prefetched per-(row,K)-block
    # edge counts and pl.when-skip fully masked tiles.

    if n_pad != n:
        x = jnp.pad(x, ((0, n_pad - n), (0, 0)))

    n_layers = len(params)
    for li, (w, a_src, a_dst, bias) in enumerate(params):
        # bf16 activations between layers; the final layer emits f32.
        out_dtype = jnp.float32 if li == n_layers - 1 else jnp.bfloat16
        x = gat_layer(x, w, a_src, a_dst, bias, adj, activation=activation,
                      out_dtype=out_dtype, row_tile=row_tile, k_tile=k_tile)
    return x[:n]


if __name__ == "__main__":
    # Small deterministic configuration.  N = 130 exercises the padding path
    # (130 -> 256) and, with 128-sized tiles, a 2x2 attention grid
    # (2 "parallel" row tiles x 2 "arbitrary" K tiles with online softmax).
    N = 130
    in_features = 16
    hidden_dims = [16, 16]
    num_head = 4
    activation = "relu"

    key = jax.random.PRNGKey(0)
    key, kx, kp = jax.random.split(key, 3)

    x = jax.random.normal(kx, (N, in_features), jnp.float32)

    # Bidirectional ring graph: edge_index of shape [2, 2N].
    i = jnp.arange(N, dtype=jnp.int32)
    j = (i + 1) % N
    edge_index = jnp.stack(
        [jnp.concatenate([i, j]), jnp.concatenate([j, i])], axis=0)

    params = init_multilayer_gat_params(kp, in_features, hidden_dims, num_head)

    out = multilayer_gat_forward(x, edge_index, params, activation=activation,
                                 row_tile=128, k_tile=128)
    out = jax.block_until_ready(out)

    assert out.shape == (N, hidden_dims[-1] * num_head), out.shape
    assert bool(jnp.all(jnp.isfinite(out)))
    print("KERNEL_OK")
</pallas_src>

<mosaic_0001>
module attributes {stable_mosaic.version = 11 : i64} {
  func.func @_gat_project_kernel(%arg0: i32, %arg1: memref<128x16xf32, #tpu.memory_space<vmem>>, %arg2: memref<16x72xbf16, #tpu.memory_space<vmem>>, %arg3: memref<128x64xbf16, #tpu.memory_space<vmem>>, %arg4: memref<128x8xf32, #tpu.memory_space<vmem>>) attributes {dimension_semantics = [#tpu.dimension_semantics<parallel>], iteration_bounds = array<i64: 2>, scalar_prefetch = 0 : i64, scratch_operands = 0 : i64, tpu.core_type = #tpu.core_type<tc>, window_params = [{transform_indices = @transform_0, window_bounds = array<i64: 128, 16>}, {pipeline_mode = #tpu.pipeline_mode<synchronous>, transform_indices = @transform_1, window_bounds = array<i64: 16, 72>}, {transform_indices = @transform_2, window_bounds = array<i64: 128, 64>}, {transform_indices = @transform_3, window_bounds = array<i64: 128, 8>}]} {
    %c0 = arith.constant 0 : index
    %c0_0 = arith.constant 0 : index
    %0 = vector.load %arg1[%c0, %c0_0] : memref<128x16xf32, #tpu.memory_space<vmem>>, vector<128x16xf32>
    %1 = arith.truncf %0 : vector<128x16xf32> to vector<128x16xbf16>
    %c0_1 = arith.constant 0 : index
    %c0_2 = arith.constant 0 : index
    %2 = vector.load %arg2[%c0_1, %c0_2] : memref<16x72xbf16, #tpu.memory_space<vmem>>, vector<16x72xbf16>
    %cst = arith.constant dense<0.000000e+00> : vector<128x72xf32>
    %3 = tpu.matmul %1, %2, %cst {dimension_numbers = #tpu.dot_dimension_numbers<[1], [0], [0], [1], [0, 0, 1, 1], [], []>} : vector<128x16xbf16>, vector<16x72xbf16>, vector<128x72xf32> -> vector<128x72xf32>
    %4 = vector.extract_strided_slice %3 {offsets = [0, 0], sizes = [128, 64], strides = [1, 1]} : vector<128x72xf32> to vector<128x64xf32>
    %5 = arith.truncf %4 : vector<128x64xf32> to vector<128x64xbf16>
    %c0_3 = arith.constant 0 : index
    %c0_4 = arith.constant 0 : index
    %6 = vector.load %arg3[%c0_3, %c0_4] : memref<128x64xbf16, #tpu.memory_space<vmem>>, vector<128x64xbf16>
    tpu.vector_store %arg3[%c0_3, %c0_4], %5 {strides = array<i32>} : memref<128x64xbf16, #tpu.memory_space<vmem>>, vector<128x64xbf16>,
    %7 = vector.extract_strided_slice %3 {offsets = [0, 64], sizes = [128, 8], strides = [1, 1]} : vector<128x72xf32> to vector<128x8xf32>
    %c0_5 = arith.constant 0 : index
    %c0_6 = arith.constant 0 : index
    %8 = vector.load %arg4[%c0_5, %c0_6] : memref<128x8xf32, #tpu.memory_space<vmem>>, vector<128x8xf32>
    tpu.vector_store %arg4[%c0_5, %c0_6], %7 {strides = array<i32>} : memref<128x8xf32, #tpu.memory_space<vmem>>, vector<128x8xf32>,
    return
  }
  func.func @transform_0(%arg0: i32) -> (i32, i32) {
    %c0_i32 = arith.constant 0 : i32
    %c0_i32_0 = arith.constant 0 : i32
    return %arg0, %c0_i32 : i32, i32
  }
  func.func @transform_1(%arg0: i32) -> (i32, i32) {
    %c0_i32 = arith.constant 0 : i32
    %c0_i32_0 = arith.constant 0 : i32
    %c0_i32_1 = arith.constant 0 : i32
    return %c0_i32, %c0_i32_0 : i32, i32
  }
  func.func @transform_2(%arg0: i32) -> (i32, i32) {
    %c0_i32 = arith.constant 0 : i32
    %c0_i32_0 = arith.constant 0 : i32
    return %arg0, %c0_i32 : i32, i32
  }
  func.func @transform_3(%arg0: i32) -> (i32, i32) {
    %c0_i32 = arith.constant 0 : i32
    %c0_i32_0 = arith.constant 0 : i32
    return %arg0, %c0_i32 : i32, i32
  }
}

</mosaic_0001>

<llo_original>
// kernel: tpu_custom_call.1
$region0: #{tpu_custom_call.1}
  #allocation0 [shape = 'u32[]', space=smem, size = 0x4, offset = 0x4, fixed_abs, tag = 'smem constant byte address 0x4 - core index']
  #allocation1 [shape = 'u32[144,128]{1,0:T(1,128)}', space=vmem, size = 0x12000, scoped, tag = 'internal scratch']
  %s0 = inlined_call_operand.vmem [shape: f32[256,16], index: 0, kind: input, shape index: {}]
  %s1 = inlined_call_operand.vmem [shape: bf16[16,72], index: 1, kind: input, shape index: {}]
  %s2 = inlined_call_operand.vmem [shape: bf16[256,64], index: 2, kind: output, shape index: {0}]
  %s3 = inlined_call_operand.vmem [shape: f32[256,8], index: 3, kind: output, shape index: {1}]
  %4 = xla_tuple %s2, %s3
  %s5 = sld [smem:[#allocation0]]
  $region49: #{tpu_custom_call.1} parent=0
    _
  %s7 = ssub.s32 1, %s5
  %s8 = scalar_select 0, %s7, %s5
  loop: start=0, step=1, limit=4
  $region2: #{tpu_custom_call.1} parent=0 // loop_pre_header
    _
  $region3: #{tpu_custom_call.1} parent=0 // loop_header
    %s10 = sphi 0, %s14
    %p11 = scmp.ge.s32.totalorder %s10, 4
    %s20 = sphi 0, %s22
    %s23 = sphi 0, %s20
    %s24 = sphi 0, %s23
    %s40 = sphi 0, %s24
    %s44 = sphi 0, %s44
    %s46 = sphi 0, %s44
    %s47 = sphi 0, %s46
    %s61 = sphi 0, %s47
    %s67 = sphi 0, %s69
    %s70 = sphi 0, %s67
    %s71 = sphi 0, %s70
    %s87 = sphi 0, %s71
    %s93 = sphi 0, %s95
    %s96 = sphi 0, %s93
    %s97 = sphi 0, %s96
    %s113 = sphi 0, %s97
  $region4: #{tpu_custom_call.1} parent=0 // loop_header_branch
    %13 = sbr.rel (%p11) target = $region8
  $region5: #{tpu_custom_call.1} parent=0 // loop_body
    %s15 = ssub.s32 %s10, 1
    %s16 = ssub.s32 %s10, 2
    %s17 = sadd.s32 %s10, 1
    %s18 = ssub.s32 %s10, %s17
    %p19 = scmp.eq.s32.totalorder %s18, 0
    %s21 = sadd.s32 %s20, 1
    %s22 = scalar_select %p19, %s20, %s21
    %p25 = pneg %p19
    %p26 = scmp.eq.s32.totalorder %s10, 1
    %p27 = por %p25, %p26
    %p28 = scmp.ne.s32.totalorder %s20, %s23
    %p29 = scmp.eq.s32.totalorder %s10, 0
    %p30 = por %p28, %p29
    %p31 = scmp.ne.s32.totalorder %s20, %s23
    %p32 = scmp.eq.s32.totalorder %s15, 1
    %p33 = por %p31, %p32
    %p34 = scmp.ne.s32.totalorder %s23, %s24
    %p35 = scmp.eq.s32.totalorder %s15, 0
    %p36 = por %p34, %p35
    %p37 = scmp.ne.s32.totalorder %s23, %s24
    %p38 = scmp.eq.s32.totalorder %s16, 1
    %p39 = por %p37, %p38
    %p41 = scmp.ne.s32.totalorder %s24, %s40
    %p42 = scmp.eq.s32.totalorder %s16, 0
    %p43 = por %p41, %p42
    %s45 = sadd.s32 %s44, 1
    %p48 = scmp.eq.s32.totalorder %s10, 1
    %p49 = scmp.ne.s32.totalorder %s44, %s46
    %p50 = scmp.eq.s32.totalorder %s10, 0
    %p51 = por %p49, %p50
    %p52 = scmp.ne.s32.totalorder %s44, %s46
    %p53 = scmp.eq.s32.totalorder %s15, 1
    %p54 = por %p52, %p53
    %p55 = scmp.ne.s32.totalorder %s46, %s47
    %p56 = scmp.eq.s32.totalorder %s15, 0
    %p57 = por %p55, %p56
    %p58 = scmp.ne.s32.totalorder %s46, %s47
    %p59 = scmp.eq.s32.totalorder %s16, 1
    %p60 = por %p58, %p59
    %p62 = scmp.ne.s32.totalorder %s47, %s61
    %p63 = scmp.eq.s32.totalorder %s16, 0
    %p64 = por %p62, %p63
    %s65 = ssub.s32 %s10, %s17
    %p66 = scmp.eq.s32.totalorder %s65, 0
    %s68 = sadd.s32 %s67, 1
    %s69 = scalar_select %p66, %s67, %s68
    %p72 = pneg %p66
    %p73 = scmp.eq.s32.totalorder %s10, 1
    %p74 = por %p72, %p73
    %p75 = scmp.ne.s32.totalorder %s67, %s70
    %p76 = scmp.eq.s32.totalorder %s10, 0
    %p77 = por %p75, %p76
    %p78 = scmp.ne.s32.totalorder %s67, %s70
    %p79 = scmp.eq.s32.totalorder %s15, 1
    %p80 = por %p78, %p79
    %p81 = scmp.ne.s32.totalorder %s70, %s71
    %p82 = scmp.eq.s32.totalorder %s15, 0
    %p83 = por %p81, %p82
    %p84 = scmp.ne.s32.totalorder %s70, %s71
    %p85 = scmp.eq.s32.totalorder %s16, 1
    %p86 = por %p84, %p85
    %p88 = scmp.ne.s32.totalorder %s71, %s87
    %p89 = scmp.eq.s32.totalorder %s16, 0
    %p90 = por %p88, %p89
    %s91 = ssub.s32 %s10, %s17
    %p92 = scmp.eq.s32.totalorder %s91, 0
    %s94 = sadd.s32 %s93, 1
    %s95 = scalar_select %p92, %s93, %s94
    %p98 = pneg %p92
    %p99 = scmp.eq.s32.totalorder %s10, 1
    %p100 = por %p98, %p99
    %p101 = scmp.ne.s32.totalorder %s93, %s96
    %p102 = scmp.eq.s32.totalorder %s10, 0
    %p103 = por %p101, %p102
    %p104 = scmp.ne.s32.totalorder %s93, %s96
    %p105 = scmp.eq.s32.totalorder %s15, 1
    %p106 = por %p104, %p105
    %p107 = scmp.ne.s32.totalorder %s96, %s97
    %p108 = scmp.eq.s32.totalorder %s15, 0
    %p109 = por %p107, %p108
    %p110 = scmp.ne.s32.totalorder %s96, %s97
    %p111 = scmp.eq.s32.totalorder %s16, 1
    %p112 = por %p110, %p111
    %p114 = scmp.ne.s32.totalorder %s97, %s113
    %p115 = scmp.eq.s32.totalorder %s16, 0
    %p116 = por %p114, %p115
    %p117 = scmp.le.s32.totalorder 1, %s10
    %p118 = scmp.lt.s32.totalorder %s10, 3
    %p119 = pnand %p117, %p118
    %p120 = pneg %p119
    // Predicated region
    $region9: #{tpu_custom_call.1} parent=5 // pred_check
      _
    $region10: #{tpu_custom_call.1} parent=5 // pred_check_branch
      %122 = sbr.rel (%p119) target = $region12
    $region11: #{tpu_custom_call.1} parent=5 // pred_region
      %s123 = ssub.s32 %s10, 1
      // Predicated region
      $region13: #{tpu_custom_call.1} parent=11 // pred_check
        %p124 = pneg %p57
      $region14: #{tpu_custom_call.1} parent=11 // pred_check_branch
        %126 = sbr.rel (%p124) target = $region16
      $region15: #{tpu_custom_call.1} parent=11 // pred_region
        _
      $region16: #{tpu_custom_call.1} parent=11 // pred_fallthru
        _
    $region12: #{tpu_custom_call.1} parent=5 // pred_fallthru
      _
    %p127 = scmp.lt.s32.totalorder %s10, 2
    // Predicated region
    $region17: #{tpu_custom_call.1} parent=5 // pred_check
      %p128 = pneg %p127
    $region18: #{tpu_custom_call.1} parent=5 // pred_check_branch
      %130 = sbr.rel (%p128) target = $region20
    $region19: #{tpu_custom_call.1} parent=5 // pred_region
      // Predicated region
      $region21: #{tpu_custom_call.1} parent=19 // pred_check
        %p131 = pneg %p30
      $region22: #{tpu_custom_call.1} parent=19 // pred_check_branch
        %133 = sbr.rel (%p131) target = $region24
      $region23: #{tpu_custom_call.1} parent=19 // pred_region
        %s134 = smul.u32 16, %s10
        %p135 = scmp.lt.s32.totalorder %s134, 31
        %s136 = scalar_select %p135, %s134, 31
        %s137 = smul.addr %s136, 8
        %s138 = scalar_lea.vmem %s0, %s137
        %s139 = smul.u32 16, %s10
      $region24: #{tpu_custom_call.1} parent=19 // pred_fallthru
        _
    $region20: #{tpu_custom_call.1} parent=5 // pred_fallthru
      _
    %p140 = scmp.le.s32.totalorder 1, %s10
    %p141 = scmp.lt.s32.totalorder %s10, 3
    %p142 = pnand %p140, %p141
    %p143 = pneg %p142
    // Predicated region
    $region25: #{tpu_custom_call.1} parent=5 // pred_check
      _
    $region26: #{tpu_custom_call.1} parent=5 // pred_check_branch
      %145 = sbr.rel (%p142) target = $region28
    $region27: #{tpu_custom_call.1} parent=5 // pred_region
      %s146 = ssub.s32 %s10, 1
      %s147 = smul.u32 16, %s15
      %p148 = scmp.lt.s32.totalorder %s147, 31
      %s149 = scalar_select %p148, %s147, 31
      %s150 = smul.addr %s149, 8
      %s151 = scalar_lea.vmem %s0, %s150
      %p152 = pneg %p36
      %p153 = pneg %p33
      %p154 = pneg %p57
      %p155 = pneg %p54
      %p156 = pneg %p83
      %p157 = pneg %p80
      %s158 = smul.u32 16, %s15
      %p159 = scmp.lt.s32.totalorder %s158, 31
      %s160 = scalar_select %p159, %s158, 31
      %s161 = smul.addr %s160, 4
      %s162 = scalar_lea.vmem %s2, %s161
      %p163 = pneg %p109
      %p164 = pneg %p106
      %s165 = smul.u32 16, %s15
      %p166 = scmp.lt.s32.totalorder %s165, 31
      %s167 = scalar_select %p166, %s165, 31
      %s168 = smul.addr %s167, 8
      %s169 = scalar_lea.vmem %s3, %s168
      %s170 = smul.u32 16, %s15
      %p171 = scmp.lt.s32.totalorder %s170, 31
      %s172 = scalar_select %p171, %s170, 31
      %s173 = smul.addr %s172, 8
      %s174 = scalar_lea.vmem %s0, %s173
      %s175 = smul.u32 16, %s15
      %s176 = smul.u32 16, %s15
      %p177 = scmp.lt.s32.totalorder %s176, 31
      %s178 = scalar_select %p177, %s176, 31
      %s179 = smul.addr %s178, 4
      %s180 = scalar_lea.vmem %s2, %s179
      %s181 = smul.u32 16, %s15
      %s182 = smul.u32 16, %s15
      %p183 = scmp.lt.s32.totalorder %s182, 31
      %s184 = scalar_select %p183, %s182, 31
      %s185 = smul.addr %s184, 8
      %s186 = scalar_lea.vmem %s3, %s185
      %s187 = smul.u32 16, %s15
      %v189 = vld [vmem:[%s174] sm:$0xff]
      %v190 = vld [vmem:[%s174 + $0x8] sm:$0xff]
      %v191 = vld [vmem:[%s174 + $0x10] sm:$0xff]
      %v192 = vld [vmem:[%s174 + $0x18] sm:$0xff]
      %v193 = vld [vmem:[%s174 + $0x20] sm:$0xff]
      %v194 = vld [vmem:[%s174 + $0x28] sm:$0xff]
      %v195 = vld [vmem:[%s174 + $0x30] sm:$0xff]
      %v196 = vld [vmem:[%s174 + $0x38] sm:$0xff]
      %v197 = vld [vmem:[%s174 + $0x40] sm:$0xff]
      %v198 = vld [vmem:[%s174 + $0x48] sm:$0xff]
      %v199 = vld [vmem:[%s174 + $0x50] sm:$0xff]
      %v200 = vld [vmem:[%s174 + $0x58] sm:$0xff]
      %v201 = vld [vmem:[%s174 + $0x60] sm:$0xff]
      %v202 = vld [vmem:[%s174 + $0x68] sm:$0xff]
      %v203 = vld [vmem:[%s174 + $0x70] sm:$0xff]
      %v204 = vld [vmem:[%s174 + $0x78] sm:$0xff]
      %v205 = vpack.c.bf16 %v190, %v189
      %v206 = vpack.c.bf16 %v192, %v191
      %v207 = vpack.c.bf16 %v194, %v193
      %v208 = vpack.c.bf16 %v196, %v195
      %v209 = vpack.c.bf16 %v198, %v197
      %v210 = vpack.c.bf16 %v200, %v199
      %v211 = vpack.c.bf16 %v202, %v201
      %v212 = vpack.c.bf16 %v204, %v203
      %v213 = vld [vmem:[%s1] sm:$0xf]
      %v214 = vld [vmem:[%s1 + $0x4] sm:$0xf]
      %v217 = vunpack.c.l.b16 %v213
      %v218 = vunpack.c.l.b16 %v214
      %v219 = vpack.c.b16 %v218, %v217
      %vm221 = vcmask 130048
      %v223 = vsel %vm221, %v205, 0
      %v226 = vsel %vm221, %v206, 0
      %v229 = vsel %vm221, %v207, 0
      %v232 = vsel %vm221, %v208, 0
      %v235 = vsel %vm221, %v209, 0
      %v238 = vsel %vm221, %v210, 0
      %v241 = vsel %vm221, %v211, 0
      %v244 = vsel %vm221, %v212, 0
      %246 = vmatprep.subr.bf16.mxu0 0
      %247 = vmatpush1.bf16.msra.mxu0 0
      %248 = vmatprep.subr.bf16.mxu0 0
      %249 = vmatpush1.bf16.msra.mxu0 0
      %250 = vmatprep.subr.bf16.mxu0 0
      %251 = vmatpush1.bf16.msra.mxu0 0
      %252 = vmatprep.subr.bf16.mxu0 0
      %253 = vmatpush1.bf16.msra.mxu0 0
      %254 = vmatprep.subr.bf16.mxu0 0
      %255 = vmatpush1.bf16.msra.mxu0 0
      %256 = vmatprep.subr.bf16.mxu0 0
      %257 = vmatpush1.bf16.msra.mxu0 0
      %258 = vmatprep.subr.bf16.mxu0 0
      %259 = vmatpush1.bf16.msra.mxu0 0
      %260 = vmatprep.subr.bf16.mxu0 0
      %261 = vmatpush1.bf16.msra.mxu0 %v219
      %262 = vmatprep.subr.bf16.mxu0 0
      %263 = vmatpush2.bf16.msra.mxu0 0
      %264 = vmatprep.subr.bf16.mxu0 0
      %265 = vmatpush2.bf16.msra.mxu0 0
      %266 = vmatprep.subr.bf16.mxu0 0
      %267 = vmatpush2.bf16.msra.mxu0 0
      %268 = vmatprep.subr.bf16.mxu0 0
      %269 = vmatpush2.bf16.msra.mxu0 0
      %270 = vmatprep.subr.bf16.mxu0 0
      %271 = vmatpush2.bf16.msra.mxu0 0
      %272 = vmatprep.subr.bf16.mxu0 0
      %273 = vmatpush2.bf16.msra.mxu0 0
      %274 = vmatprep.subr.bf16.mxu0 0
      %275 = vmatpush2.bf16.msra.mxu0 0
      %276 = vmatprep.subr.bf16.mxu0 0
      %277 = vmatpush2.bf16.msra.mxu0 0
      %278 = vmatprep.mubr.bf16.mxu0 0
      %279 = vmatmul.mubr.bf16.gmra.mxu0 %v223
      %v280 = vpop.f32.mrf.mxu0
      %v281 = vadd.f32 0.0, %v280
      %v282 = vpop.f32.mrf.mxu0
      %v283 = vpop.f32.mrf.mxu0
      %v284 = vadd.f32 0.0, %v283
      %v285 = vpop.f32.mrf.mxu0
      %286 = vmatprep.mubr.bf16.mxu0 0
      %287 = vmatmul.mubr.bf16.gmra.mxu0 %v226
      %v288 = vpop.f32.mrf.mxu0
      %v289 = vadd.f32 0.0, %v288
      %v290 = vpop.f32.mrf.mxu0
      %v291 = vpop.f32.mrf.mxu0
      %v292 = vadd.f32 0.0, %v291
      %v293 = vpop.f32.mrf.mxu0
      %294 = vmatprep.mubr.bf16.mxu0 0
      %295 = vmatmul.mubr.bf16.gmra.mxu0 %v229
      %v296 = vpop.f32.mrf.mxu0
      %v297 = vadd.f32 0.0, %v296
      %v298 = vpop.f32.mrf.mxu0
      %v299 = vpop.f32.mrf.mxu0
      %v300 = vadd.f32 0.0, %v299
      %v301 = vpop.f32.mrf.mxu0
      %302 = vmatprep.mubr.bf16.mxu0 0
      %303 = vmatmul.mubr.bf16.gmra.mxu0 %v232
      %v304 = vpop.f32.mrf.mxu0
      %v305 = vadd.f32 0.0, %v304
      %v306 = vpop.f32.mrf.mxu0
      %v307 = vpop.f32.mrf.mxu0
      %v308 = vadd.f32 0.0, %v307
      %v309 = vpop.f32.mrf.mxu0
      %310 = vmatprep.mubr.bf16.mxu0 0
      %311 = vmatmul.mubr.bf16.gmra.mxu0 %v235
      %v312 = vpop.f32.mrf.mxu0
      %v313 = vadd.f32 0.0, %v312
      %v314 = vpop.f32.mrf.mxu0
      %v315 = vpop.f32.mrf.mxu0
      %v316 = vadd.f32 0.0, %v315
      %v317 = vpop.f32.mrf.mxu0
      %318 = vmatprep.mubr.bf16.mxu0 0
      %319 = vmatmul.mubr.bf16.gmra.mxu0 %v238
      %v320 = vpop.f32.mrf.mxu0
      %v321 = vadd.f32 0.0, %v320
      %v322 = vpop.f32.mrf.mxu0
      %v323 = vpop.f32.mrf.mxu0
      %v324 = vadd.f32 0.0, %v323
      %v325 = vpop.f32.mrf.mxu0
      %326 = vmatprep.mubr.bf16.mxu0 0
      %327 = vmatmul.mubr.bf16.gmra.mxu0 %v241
      %v328 = vpop.f32.mrf.mxu0
      %v329 = vadd.f32 0.0, %v328
      %v330 = vpop.f32.mrf.mxu0
      %v331 = vpop.f32.mrf.mxu0
      %v332 = vadd.f32 0.0, %v331
      %v333 = vpop.f32.mrf.mxu0
      %334 = vmatprep.mubr.bf16.mxu0 0
      %335 = vmatmul.mubr.bf16.gmra.mxu0 %v244
      %v336 = vpop.f32.mrf.mxu0
      %v337 = vadd.f32 0.0, %v336
      %v338 = vpop.f32.mrf.mxu0
      %v339 = vpop.f32.mrf.mxu0
      %v340 = vadd.f32 0.0, %v339
      %v341 = vpop.f32.mrf.mxu0
      %342 = vdwg.mxu0
      %v343 = vpack.c.bf16 %v284, %v281
      %v344 = vpack.c.bf16 %v292, %v289
      %v345 = vpack.c.bf16 %v300, %v297
      %v346 = vpack.c.bf16 %v308, %v305
      %v347 = vpack.c.bf16 %v316, %v313
      %v348 = vpack.c.bf16 %v324, %v321
      %v349 = vpack.c.bf16 %v332, %v329
      %v350 = vpack.c.bf16 %v340, %v337
      %v359 = vunpack.c.l.b16 %v343
      %v360 = vunpack.c.h.b16 %v343
      %v361 = vunpack.c.l.b16 %v344
      %v362 = vunpack.c.h.b16 %v344
      %v363 = vunpack.c.l.b16 %v345
      %v364 = vunpack.c.h.b16 %v345
      %v365 = vunpack.c.l.b16 %v346
      %v366 = vunpack.c.h.b16 %v346
      %v367 = vunpack.c.l.b16 %v347
      %v368 = vunpack.c.h.b16 %v347
      %v369 = vunpack.c.l.b16 %v348
      %v370 = vunpack.c.h.b16 %v348
      %v371 = vunpack.c.l.b16 %v349
      %v372 = vunpack.c.h.b16 %v349
      %v373 = vunpack.c.l.b16 %v350
      %v374 = vunpack.c.h.b16 %v350
      %v375 = vpack.c.b16 %v359, %v359
      %v376 = vpack.c.b16 %v360, %v360
      %v377 = vpack.c.b16 %v361, %v361
      %v378 = vpack.c.b16 %v362, %v362
      %v379 = vpack.c.b16 %v363, %v363
      %v380 = vpack.c.b16 %v364, %v364
      %v381 = vpack.c.b16 %v365, %v365
      %v382 = vpack.c.b16 %v366, %v366
      %v383 = vpack.c.b16 %v367, %v367
      %v384 = vpack.c.b16 %v368, %v368
      %v385 = vpack.c.b16 %v369, %v369
      %v386 = vpack.c.b16 %v370, %v370
      %v387 = vpack.c.b16 %v371, %v371
      %v388 = vpack.c.b16 %v372, %v372
      %v389 = vpack.c.b16 %v373, %v373
      %v390 = vpack.c.b16 %v374, %v374
      %vm407 = vcmask 519168
      %408 = vst.msk [vmem:[%s180] sm:$0xf] %vm407, %v375
      %409 = vst.msk [vmem:[%s180 + $0x4] sm:$0xf] %vm407, %v376
      %410 = vst.msk [vmem:[%s180 + $0x8] sm:$0xf] %vm407, %v377
      %411 = vst.msk [vmem:[%s180 + $0xc] sm:$0xf] %vm407, %v378
      %412 = vst.msk [vmem:[%s180 + $0x10] sm:$0xf] %vm407, %v379
      %413 = vst.msk [vmem:[%s180 + $0x14] sm:$0xf] %vm407, %v380
      %414 = vst.msk [vmem:[%s180 + $0x18] sm:$0xf] %vm407, %v381
      %415 = vst.msk [vmem:[%s180 + $0x1c] sm:$0xf] %vm407, %v382
      %416 = vst.msk [vmem:[%s180 + $0x20] sm:$0xf] %vm407, %v383
      %417 = vst.msk [vmem:[%s180 + $0x24] sm:$0xf] %vm407, %v384
      %418 = vst.msk [vmem:[%s180 + $0x28] sm:$0xf] %vm407, %v385
      %419 = vst.msk [vmem:[%s180 + $0x2c] sm:$0xf] %vm407, %v386
      %420 = vst.msk [vmem:[%s180 + $0x30] sm:$0xf] %vm407, %v387
      %421 = vst.msk [vmem:[%s180 + $0x34] sm:$0xf] %vm407, %v388
      %422 = vst.msk [vmem:[%s180 + $0x38] sm:$0xf] %vm407, %v389
      %423 = vst.msk [vmem:[%s180 + $0x3c] sm:$0xf] %vm407, %v390
      %440 = vrot.lane.b32.xlu0 %v281, 64
      %v441 = vpop.permute.xlu0 %440
      %442 = vrot.lane.b32.xlu0 %v284, 64
      %v443 = vpop.permute.xlu0 %442
      %444 = vrot.lane.b32.xlu0 %v289, 64
      %v445 = vpop.permute.xlu0 %444
      %446 = vrot.lane.b32.xlu0 %v292, 64
      %v447 = vpop.permute.xlu0 %446
      %448 = vrot.lane.b32.xlu0 %v297, 64
      %v449 = vpop.permute.xlu0 %448
      %450 = vrot.lane.b32.xlu0 %v300, 64
      %v451 = vpop.permute.xlu0 %450
      %452 = vrot.lane.b32.xlu0 %v305, 64
      %v453 = vpop.permute.xlu0 %452
      %454 = vrot.lane.b32.xlu0 %v308, 64
      %v455 = vpop.permute.xlu0 %454
      %456 = vrot.lane.b32.xlu0 %v313, 64
      %v457 = vpop.permute.xlu0 %456
      %458 = vrot.lane.b32.xlu0 %v316, 64
      %v459 = vpop.permute.xlu0 %458
      %460 = vrot.lane.b32.xlu0 %v321, 64
      %v461 = vpop.permute.xlu0 %460
      %462 = vrot.lane.b32.xlu0 %v324, 64
      %v463 = vpop.permute.xlu0 %462
      %464 = vrot.lane.b32.xlu0 %v329, 64
      %v465 = vpop.permute.xlu0 %464
      %466 = vrot.lane.b32.xlu0 %v332, 64
      %v467 = vpop.permute.xlu0 %466
      %468 = vrot.lane.b32.xlu0 %v337, 64
      %v469 = vpop.permute.xlu0 %468
      %470 = vrot.lane.b32.xlu0 %v340, 64
      %v471 = vpop.permute.xlu0 %470
      %vm488 = vcmask 64512
      %489 = vst.msk [vmem:[%s186] sm:$0xff] %vm488, %v441
      %490 = vst.msk [vmem:[%s186 + $0x8] sm:$0xff] %vm488, %v443
      %491 = vst.msk [vmem:[%s186 + $0x10] sm:$0xff] %vm488, %v445
      %492 = vst.msk [vmem:[%s186 + $0x18] sm:$0xff] %vm488, %v447
      %493 = vst.msk [vmem:[%s186 + $0x20] sm:$0xff] %vm488, %v449
      %494 = vst.msk [vmem:[%s186 + $0x28] sm:$0xff] %vm488, %v451
      %495 = vst.msk [vmem:[%s186 + $0x30] sm:$0xff] %vm488, %v453
      %496 = vst.msk [vmem:[%s186 + $0x38] sm:$0xff] %vm488, %v455
      %497 = vst.msk [vmem:[%s186 + $0x40] sm:$0xff] %vm488, %v457
      %498 = vst.msk [vmem:[%s186 + $0x48] sm:$0xff] %vm488, %v459
      %499 = vst.msk [vmem:[%s186 + $0x50] sm:$0xff] %vm488, %v461
      %500 = vst.msk [vmem:[%s186 + $0x58] sm:$0xff] %vm488, %v463
      %501 = vst.msk [vmem:[%s186 + $0x60] sm:$0xff] %vm488, %v465
      %502 = vst.msk [vmem:[%s186 + $0x68] sm:$0xff] %vm488, %v467
      %503 = vst.msk [vmem:[%s186 + $0x70] sm:$0xff] %vm488, %v469
      %504 = vst.msk [vmem:[%s186 + $0x78] sm:$0xff] %vm488, %v471
      %s505 = smul.u32 16, %s15
      %p506 = scmp.lt.s32.totalorder %s505, 31
      %s507 = scalar_select %p506, %s505, 31
      %s508 = smul.addr %s507, 4
      %s509 = scalar_lea.vmem %s2, %s508
      %s510 = smul.u32 16, %s15
      %p511 = scmp.lt.s32.totalorder %s510, 31
      %s512 = scalar_select %p511, %s510, 31
      %s513 = smul.addr %s512, 8
      %s514 = scalar_lea.vmem %s3, %s513
      // Predicated region
      $region29: #{tpu_custom_call.1} parent=27 // pred_check
        %p515 = pneg %p80
      $region30: #{tpu_custom_call.1} parent=27 // pred_check_branch
        %517 = sbr.rel (%p515) target = $region32
      $region31: #{tpu_custom_call.1} parent=27 // pred_region
        %s518 = smul.u32 16, %s15
      $region32: #{tpu_custom_call.1} parent=27 // pred_fallthru
        _
      // Predicated region
      $region33: #{tpu_custom_call.1} parent=27 // pred_check
        %p519 = pneg %p106
      $region34: #{tpu_custom_call.1} parent=27 // pred_check_branch
        %521 = sbr.rel (%p519) target = $region36
      $region35: #{tpu_custom_call.1} parent=27 // pred_region
        %s522 = smul.u32 16, %s15
      $region36: #{tpu_custom_call.1} parent=27 // pred_fallthru
        _
    $region28: #{tpu_custom_call.1} parent=5 // pred_fallthru
      _
    %p523 = scmp.le.s32.totalorder 2, %s10
    // Predicated region
    $region37: #{tpu_custom_call.1} parent=5 // pred_check
      %p524 = pneg %p523
    $region38: #{tpu_custom_call.1} parent=5 // pred_check_branch
      %526 = sbr.rel (%p524) target = $region40
    $region39: #{tpu_custom_call.1} parent=5 // pred_region
      %s527 = ssub.s32 %s10, 2
      // Predicated region
      $region41: #{tpu_custom_call.1} parent=39 // pred_check
        %p528 = pneg %p86
      $region42: #{tpu_custom_call.1} parent=39 // pred_check_branch
        %530 = sbr.rel (%p528) target = $region44
      $region43: #{tpu_custom_call.1} parent=39 // pred_region
        %s531 = smul.u32 16, %s16
        %p532 = scmp.lt.s32.totalorder %s531, 31
        %s533 = scalar_select %p532, %s531, 31
        %s534 = smul.addr %s533, 4
        %s535 = scalar_lea.vmem %s2, %s534
      $region44: #{tpu_custom_call.1} parent=39 // pred_fallthru
        _
      // Predicated region
      $region45: #{tpu_custom_call.1} parent=39 // pred_check
        %p536 = pneg %p112
      $region46: #{tpu_custom_call.1} parent=39 // pred_check_branch
        %538 = sbr.rel (%p536) target = $region48
      $region47: #{tpu_custom_call.1} parent=39 // pred_region
        %s539 = smul.u32 16, %s16
        %p540 = scmp.lt.s32.totalorder %s539, 31
        %s541 = scalar_select %p540, %s539, 31
        %s542 = smul.addr %s541, 8
        %s543 = scalar_lea.vmem %s3, %s542
      $region48: #{tpu_custom_call.1} parent=39 // pred_fallthru
        _
    $region40: #{tpu_custom_call.1} parent=5 // pred_fallthru
      _
  $region6: #{tpu_custom_call.1} parent=0 // loop_footer
    %s14 = sadd.s32 1, %s10
  $region7: #{tpu_custom_call.1} parent=0 // loop_footer_branch
    %9 = sbr.rel target = $region3
  $region8: #{tpu_custom_call.1} parent=0 // loop_exit
    _

</llo_original>
